<compile_context>
chip_gen: v7x
topology: tpu7x:2x2x1
jax: 0.10.0
libtpu: 0.0.40
codegen_flags: <defaults>
</compile_context>

<pallas_src>
import jax
import jax.numpy as jnp
from jax.experimental import pallas as pl
from jax.experimental.pallas import tpu as pltpu


def _round_up(x, m):
    return (x + m - 1) // m * m


def _choose_tiling(batch, max_tile_b):
    """Pick a 128-aligned batch tile and padded batch size.

    Goals: (a) large tiles to amortize per-grid-step overhead, (b) >=2 grid
    steps whenever the batch allows it so v7x's two TensorCores both get work
    via the "parallel" batch axis, (c) keep the lane (batch) dim a multiple of
    128 so all loads/stores stay lane-dense and unmasked.
    """
    b128 = _round_up(max(batch, 1), 128)
    max_tile = max(128, _round_up(max_tile_b, 128))
    n_steps = max(1, -(-b128 // max_tile))
    if b128 >= 256:
        n_steps = max(n_steps, 2)
    tile_b = _round_up(-(-b128 // n_steps), 128)
    b_pad = n_steps * tile_b
    return tile_b, b_pad, n_steps


def policy_mlp_kernel(x_ref, w1_ref, b1_ref, w2_ref, b2_ref, w3_ref, b3_ref,
                      o_ref):
    """Fused MLP + softmax, feature-major: activations are [features, TILE_B]
    so the batch lives on the 128-lane axis; weights/biases stay VMEM-resident
    across the batch grid."""
    x = x_ref[...]                                        # [obs_dim, T]

    # fc1: relu(W1 @ x + b1)   (bf16 MXU, f32 accumulation)
    h1 = jnp.dot(w1_ref[...], x, preferred_element_type=jnp.float32)
    h1 = jnp.maximum(h1 + b1_ref[...], 0.0).astype(w2_ref.dtype)

    # fc2: relu(W2 @ h1 + b2)
    h2 = jnp.dot(w2_ref[...], h1, preferred_element_type=jnp.float32)
    h2 = jnp.maximum(h2 + b2_ref[...], 0.0).astype(w3_ref.dtype)

    # fc3 (+ softmax)
    logits = jnp.dot(w3_ref[...], h2, preferred_element_type=jnp.float32)
    logits = logits + b3_ref[...]

    if o_ref.shape[0] == 2 and w3_ref.shape[0] == 1:
        # 2-class path: w3_ref holds the single difference row w3[1]-w3[0], so
        # `logits` is d = l1 - l0.  softmax == sigmoid:
        #   p0 = 1/(1+exp(d)), p1 = 1 - p0.
        # exp + approx reciprocal both run on the EUP slot -> near-free
        # epilogue; no cross-sublane max/sum reductions, no concat.
        d = jnp.clip(logits, -30.0, 30.0)                 # exact: sigmoid saturated
        p0 = pl.reciprocal(1.0 + jnp.exp(d), approx=True)
        o_ref[0:1, :] = p0
        o_ref[1:2, :] = 1.0 - p0
    else:
        m = jnp.max(logits, axis=0, keepdims=True)
        e = jnp.exp(logits - m)
        o_ref[...] = e / jnp.sum(e, axis=0, keepdims=True)


def policy_nn_v2_forward_fm(x_fm, params, *, tile_b=32768,
                            compute_dtype=jnp.bfloat16,
                            vmem_limit_bytes=None):
    """Feature-major entry point (zero wrapper-side layout copies).

    x_fm: [obs_dim, B]; returns float32 softmax probs [num_actions, B].
    Params in PyTorch layout: w [out, in], b [out].
    """
    w1, b1 = params["w1"], params["b1"]
    w2, b2 = params["w2"], params["b2"]
    w3, b3 = params["w3"], params["b3"]

    obs_dim, B = x_fm.shape
    num_actions = w3.shape[0]

    TILE_B, B_pad, n_steps = _choose_tiling(B, tile_b)

    # Stream the input in the compute dtype (bf16 default: halves input DMA
    # and hits the native MXU path on v5e/v6e/v7x); pad batch tail with zeros.
    x_c = x_fm.astype(compute_dtype)
    if B_pad != B:
        x_c = jnp.pad(x_c, ((0, 0), (0, B_pad - B)))

    # Weights in compute dtype; biases stay f32 column vectors (added to the
    # f32 accumulators, broadcast along the lane/batch axis).
    w1c = w1.astype(compute_dtype)
    w2c = w2.astype(compute_dtype)
    b1c = b1.reshape(-1, 1).astype(jnp.float32)
    b2c = b2.reshape(-1, 1).astype(jnp.float32)
    if num_actions == 2:
        # Fold fc3 into one logit-difference row: one fewer MXU
        # stationary-weight reload per grid step and no [A, T] logits temp.
        w3c = (w3[1:2, :] - w3[0:1, :]).astype(compute_dtype)       # [1, 32]
        b3c = (b3[1:2] - b3[0:1]).reshape(1, 1).astype(jnp.float32)  # [1, 1]
    else:
        w3c = w3.astype(compute_dtype)
        b3c = b3.reshape(-1, 1).astype(jnp.float32)

    if vmem_limit_bytes is None:
        # ~0.5 KiB live VMEM per batch column (double-buffered x/out blocks +
        # f32/bf16 activation temps) with headroom; clamp to 48 MiB so it fits
        # v7x's 64 MiB physical VMEM while exceeding v5e's 16 MiB default
        # scoped limit.
        vmem_limit_bytes = int(min(max(32 * 2**20, 768 * TILE_B), 48 * 2**20))

    const = lambda i: (0, 0)   # weights/biases resident across the batch grid

    out_fm = pl.pallas_call(
        policy_mlp_kernel,
        out_shape=jax.ShapeDtypeStruct((num_actions, B_pad), jnp.float32),
        grid_spec=pltpu.PrefetchScalarGridSpec(
            num_scalar_prefetch=0,
            grid=(n_steps,),
            in_specs=[
                pl.BlockSpec((obs_dim, TILE_B), lambda i: (0, i)),   # x
                pl.BlockSpec(w1c.shape, const),                      # W1
                pl.BlockSpec(b1c.shape, const),                      # b1
                pl.BlockSpec(w2c.shape, const),                      # W2
                pl.BlockSpec(b2c.shape, const),                      # b2
                pl.BlockSpec(w3c.shape, const),                      # W3 / wd
                pl.BlockSpec(b3c.shape, const),                      # b3 / bd
            ],
            out_specs=pl.BlockSpec((num_actions, TILE_B), lambda i: (0, i)),
        ),
        compiler_params=pltpu.CompilerParams(
            dimension_semantics=("parallel",),      # megacore split on v7x
            vmem_limit_bytes=vmem_limit_bytes),
    )(x_c, w1c, b1c, w2c, b2c, w3c, b3c)

    return out_fm if B_pad == B else out_fm[:, :B]


def policy_nn_v2_forward(x, params, *, tile_b=32768,
                         compute_dtype=jnp.bfloat16):
    """PyTorch-layout wrapper: x [B, obs_dim] -> probs [B, num_actions] (f32).

    Does one input and one output transpose (layout plumbing only); for
    large-B throughput prefer policy_nn_v2_forward_fm and keep data
    feature-major at the boundary to avoid these extra HBM passes.
    """
    probs_fm = policy_nn_v2_forward_fm(x.T, params, tile_b=tile_b,
                                       compute_dtype=compute_dtype)
    return probs_fm.T


def init_params(key, obs_dim=4, num_actions=2):
    """PyTorch Linear default init (uniform +/- 1/sqrt(fan_in)), PyTorch layout:
       weights [out, in], biases [out]."""
    ks = jax.random.split(key, 6)

    def linear(kw, kb, fan_in, fan_out):
        bound = 1.0 / jnp.sqrt(float(fan_in))
        w = jax.random.uniform(kw, (fan_out, fan_in), jnp.float32, -bound, bound)
        b = jax.random.uniform(kb, (fan_out,), jnp.float32, -bound, bound)
        return w, b

    w1, b1 = linear(ks[0], ks[1], obs_dim, 16)
    w2, b2 = linear(ks[2], ks[3], 16, 32)
    w3, b3 = linear(ks[4], ks[5], 32, num_actions)
    return {"w1": w1, "b1": b1, "w2": w2, "b2": b2, "w3": w3, "b3": b3}


def reference_forward(x, params):
    h1 = jnp.maximum(x @ params["w1"].T + params["b1"], 0.0)
    h2 = jnp.maximum(h1 @ params["w2"].T + params["b2"], 0.0)
    lg = h2 @ params["w3"].T + params["b3"]
    return jax.nn.softmax(lg, axis=-1)


if __name__ == "__main__":
    key = jax.random.PRNGKey(0)
    k_param, k_x, k_x2 = jax.random.split(key, 3)

    obs_dim, num_actions, batch = 4, 2, 8
    params = init_params(k_param, obs_dim=obs_dim, num_actions=num_actions)
    x = jax.random.normal(k_x, (batch, obs_dim), dtype=jnp.float32)
    ref = reference_forward(x, params)

    # Exact-math check (f32 compute path; only the approx reciprocal in the
    # sigmoid epilogue deviates slightly from the reference).
    out_f32 = jax.block_until_ready(
        policy_nn_v2_forward(x, params, compute_dtype=jnp.float32))
    assert out_f32.shape == (batch, num_actions)
    assert jnp.allclose(out_f32, ref, atol=1e-3, rtol=1e-3)
    assert jnp.allclose(jnp.sum(out_f32, axis=-1), 1.0, atol=1e-5)

    # Default fast path (bf16 inputs/weights, f32 MXU accumulation).
    out = jax.block_until_ready(policy_nn_v2_forward(x, params))
    assert out.shape == (batch, num_actions)
    assert jnp.allclose(out, ref, atol=2e-2, rtol=2e-2)
    assert jnp.allclose(jnp.sum(out, axis=-1), 1.0, atol=1e-5)

    # Multi-tile / padded-batch path (exercises grid=(2,) + batch padding).
    batch2 = 300
    x2 = jax.random.normal(k_x2, (batch2, obs_dim), dtype=jnp.float32)
    ref2 = reference_forward(x2, params)
    out2 = jax.block_until_ready(policy_nn_v2_forward(x2, params))
    assert out2.shape == (batch2, num_actions)
    assert jnp.allclose(out2, ref2, atol=2e-2, rtol=2e-2)

    print("KERNEL_OK")
</pallas_src>

<mosaic_0001>
module attributes {stable_mosaic.version = 11 : i64} {
  func.func @policy_mlp_kernel(%arg0: i32, %arg1: memref<4x128xf32, #tpu.memory_space<vmem>>, %arg2: memref<16x4xf32, #tpu.memory_space<vmem>>, %arg3: memref<16x1xf32, #tpu.memory_space<vmem>>, %arg4: memref<32x16xf32, #tpu.memory_space<vmem>>, %arg5: memref<32x1xf32, #tpu.memory_space<vmem>>, %arg6: memref<1x32xf32, #tpu.memory_space<vmem>>, %arg7: memref<1x1xf32, #tpu.memory_space<vmem>>, %arg8: memref<2x128xf32, #tpu.memory_space<vmem>>) attributes {dimension_semantics = [#tpu.dimension_semantics<parallel>], iteration_bounds = array<i64: 1>, scalar_prefetch = 0 : i64, scratch_operands = 0 : i64, tpu.core_type = #tpu.core_type<tc>, window_params = [{transform_indices = @transform_0, window_bounds = array<i64: 4, 128>}, {pipeline_mode = #tpu.pipeline_mode<synchronous>, transform_indices = @transform_1, window_bounds = array<i64: 16, 4>}, {pipeline_mode = #tpu.pipeline_mode<synchronous>, transform_indices = @transform_2, window_bounds = array<i64: 16, 1>}, {pipeline_mode = #tpu.pipeline_mode<synchronous>, transform_indices = @transform_3, window_bounds = array<i64: 32, 16>}, {pipeline_mode = #tpu.pipeline_mode<synchronous>, transform_indices = @transform_4, window_bounds = array<i64: 32, 1>}, {pipeline_mode = #tpu.pipeline_mode<synchronous>, transform_indices = @transform_5, window_bounds = array<i64: 1, 32>}, {pipeline_mode = #tpu.pipeline_mode<synchronous>, transform_indices = @transform_6, window_bounds = array<i64: 1, 1>}, {transform_indices = @transform_7, window_bounds = array<i64: 2, 128>}]} {
    %c0 = arith.constant 0 : index
    %c0_0 = arith.constant 0 : index
    %0 = vector.load %arg1[%c0, %c0_0] : memref<4x128xf32, #tpu.memory_space<vmem>>, vector<4x128xf32>
    %c0_1 = arith.constant 0 : index
    %c0_2 = arith.constant 0 : index
    %1 = vector.load %arg2[%c0_1, %c0_2] : memref<16x4xf32, #tpu.memory_space<vmem>>, vector<16x4xf32>
    %cst = arith.constant dense<0.000000e+00> : vector<16x128xf32>
    %2 = tpu.matmul %1, %0, %cst {dimension_numbers = #tpu.dot_dimension_numbers<[1], [0], [0], [1], [0, 0, 1, 1], [], []>} : vector<16x4xf32>, vector<4x128xf32>, vector<16x128xf32> -> vector<16x128xf32>
    %c0_3 = arith.constant 0 : index
    %c0_4 = arith.constant 0 : index
    %3 = vector.load %arg3[%c0_3, %c0_4] : memref<16x1xf32, #tpu.memory_space<vmem>>, vector<16x1xf32>
    %4 = vector.broadcast %3 : vector<16x1xf32> to vector<16x128xf32>
    %5 = arith.addf %2, %4 : vector<16x128xf32>
    %cst_5 = arith.constant 0.000000e+00 : f32
    %6 = vector.broadcast %cst_5 : f32 to vector<16x128xf32>
    %7 = arith.maximumf %5, %6 : vector<16x128xf32>
    %c0_6 = arith.constant 0 : index
    %c0_7 = arith.constant 0 : index
    %8 = vector.load %arg4[%c0_6, %c0_7] : memref<32x16xf32, #tpu.memory_space<vmem>>, vector<32x16xf32>
    %cst_8 = arith.constant dense<0.000000e+00> : vector<32x128xf32>
    %9 = tpu.matmul %8, %7, %cst_8 {dimension_numbers = #tpu.dot_dimension_numbers<[1], [0], [0], [1], [0, 0, 1, 1], [], []>} : vector<32x16xf32>, vector<16x128xf32>, vector<32x128xf32> -> vector<32x128xf32>
    %c0_9 = arith.constant 0 : index
    %c0_10 = arith.constant 0 : index
    %10 = vector.load %arg5[%c0_9, %c0_10] : memref<32x1xf32, #tpu.memory_space<vmem>>, vector<32x1xf32>
    %11 = vector.broadcast %10 : vector<32x1xf32> to vector<32x128xf32>
    %12 = arith.addf %9, %11 : vector<32x128xf32>
    %cst_11 = arith.constant 0.000000e+00 : f32
    %13 = vector.broadcast %cst_11 : f32 to vector<32x128xf32>
    %14 = arith.maximumf %12, %13 : vector<32x128xf32>
    %c0_12 = arith.constant 0 : index
    %c0_13 = arith.constant 0 : index
    %15 = vector.load %arg6[%c0_12, %c0_13] : memref<1x32xf32, #tpu.memory_space<vmem>>, vector<1x32xf32>
    %cst_14 = arith.constant dense<0.000000e+00> : vector<1x128xf32>
    %16 = tpu.matmul %15, %14, %cst_14 {dimension_numbers = #tpu.dot_dimension_numbers<[1], [0], [0], [1], [0, 0, 1, 1], [], []>} : vector<1x32xf32>, vector<32x128xf32>, vector<1x128xf32> -> vector<1x128xf32>
    %c0_15 = arith.constant 0 : index
    %c0_16 = arith.constant 0 : index
    %17 = vector.load %arg7[%c0_15, %c0_16] : memref<1x1xf32, #tpu.memory_space<vmem>>, vector<1x1xf32>
    %18 = vector.broadcast %17 : vector<1x1xf32> to vector<1x128xf32>
    %19 = arith.addf %16, %18 : vector<1x128xf32>
    %cst_17 = arith.constant -3.000000e+01 : f32
    %cst_18 = arith.constant 3.000000e+01 : f32
    %20 = vector.broadcast %cst_17 : f32 to vector<1x128xf32>
    %21 = arith.maximumf %20, %19 : vector<1x128xf32>
    %22 = vector.broadcast %cst_18 : f32 to vector<1x128xf32>
    %23 = arith.minimumf %22, %21 : vector<1x128xf32>
    %24 = math.exp %23 : vector<1x128xf32>
    %cst_19 = arith.constant 1.000000e+00 : f32
    %25 = vector.broadcast %cst_19 : f32 to vector<1x128xf32>
    %26 = arith.addf %25, %24 : vector<1x128xf32>
    %27 = tpu.reciprocal %26 {approx = true} : vector<1x128xf32> -> vector<1x128xf32>
    %c0_20 = arith.constant 0 : index
    %c0_21 = arith.constant 0 : index
    %28 = vector.load %arg8[%c0_20, %c0_21] : memref<2x128xf32, #tpu.memory_space<vmem>>, vector<1x128xf32>
    tpu.vector_store %arg8[%c0_20, %c0_21], %27 {strides = array<i32>} : memref<2x128xf32, #tpu.memory_space<vmem>>, vector<1x128xf32>,
    %cst_22 = arith.constant 1.000000e+00 : f32
    %29 = vector.broadcast %cst_22 : f32 to vector<1x128xf32>
    %30 = arith.subf %29, %27 : vector<1x128xf32>
    %c1 = arith.constant 1 : index
    %c0_23 = arith.constant 0 : index
    %31 = vector.load %arg8[%c1, %c0_23] : memref<2x128xf32, #tpu.memory_space<vmem>>, vector<1x128xf32>
    tpu.vector_store %arg8[%c1, %c0_23], %30 {strides = array<i32>} : memref<2x128xf32, #tpu.memory_space<vmem>>, vector<1x128xf32>,
    return
  }
  func.func @transform_0(%arg0: i32) -> (i32, i32) {
    %c0_i32 = arith.constant 0 : i32
    %c0_i32_0 = arith.constant 0 : i32
    return %c0_i32, %arg0 : i32, i32
  }
  func.func @transform_1(%arg0: i32) -> (i32, i32) {
    %c0_i32 = arith.constant 0 : i32
    %c0_i32_0 = arith.constant 0 : i32
    %c0_i32_1 = arith.constant 0 : i32
    return %c0_i32, %c0_i32_0 : i32, i32
  }
  func.func @transform_2(%arg0: i32) -> (i32, i32) {
    %c0_i32 = arith.constant 0 : i32
    %c0_i32_0 = arith.constant 0 : i32
    %c0_i32_1 = arith.constant 0 : i32
    return %c0_i32, %c0_i32_0 : i32, i32
  }
  func.func @transform_3(%arg0: i32) -> (i32, i32) {
    %c0_i32 = arith.constant 0 : i32
    %c0_i32_0 = arith.constant 0 : i32
    %c0_i32_1 = arith.constant 0 : i32
    return %c0_i32, %c0_i32_0 : i32, i32
  }
  func.func @transform_4(%arg0: i32) -> (i32, i32) {
    %c0_i32 = arith.constant 0 : i32
    %c0_i32_0 = arith.constant 0 : i32
    %c0_i32_1 = arith.constant 0 : i32
    return %c0_i32, %c0_i32_0 : i32, i32
  }
  func.func @transform_5(%arg0: i32) -> (i32, i32) {
    %c0_i32 = arith.constant 0 : i32
    %c0_i32_0 = arith.constant 0 : i32
    %c0_i32_1 = arith.constant 0 : i32
    return %c0_i32, %c0_i32_0 : i32, i32
  }
  func.func @transform_6(%arg0: i32) -> (i32, i32) {
    %c0_i32 = arith.constant 0 : i32
    %c0_i32_0 = arith.constant 0 : i32
    %c0_i32_1 = arith.constant 0 : i32
    return %c0_i32, %c0_i32_0 : i32, i32
  }
  func.func @transform_7(%arg0: i32) -> (i32, i32) {
    %c0_i32 = arith.constant 0 : i32
    %c0_i32_0 = arith.constant 0 : i32
    return %c0_i32, %arg0 : i32, i32
  }
}

</mosaic_0001>

<llo_original>
// kernel: tpu_custom_call.1
$region0: #{tpu_custom_call.1}
  #allocation0 [shape = 'u32[]', space=smem, size = 0x4, offset = 0x4, fixed_abs, tag = 'smem constant byte address 0x4 - core index']
  #allocation1 [shape = 'u32[144,128]{1,0:T(1,128)}', space=vmem, size = 0x12000, scoped, tag = 'internal scratch']
  #allocation2 [shape = 'f32[1,1]{1,0:T(1,128)S(1)}', space=vmem, size = 0x200, scoped, tag = 'scoped memory for tpu_custom_call.1']
  %s0 = inlined_call_operand.vmem [shape: f32[4,128], index: 0, kind: input, shape index: {}]
  %s1 = inlined_call_operand.vmem [shape: f32[16,4], index: 1, kind: input, shape index: {}]
  %s2 = inlined_call_operand.vmem [shape: f32[16,1], index: 2, kind: input, shape index: {}]
  %s3 = inlined_call_operand.vmem [shape: f32[32,16], index: 3, kind: input, shape index: {}]
  %s4 = inlined_call_operand.vmem [shape: f32[32,1], index: 4, kind: input, shape index: {}]
  %s5 = inlined_call_operand.vmem [shape: f32[1,32], index: 5, kind: input, shape index: {}]
  %s6 = inlined_call_operand.<no memory space> [shape: f32[1,1], index: 6, kind: input, shape index: {}]
  %s7 = inlined_call_operand.hbm [shape: f32[2,128], index: 7, kind: output, shape index: {}]
  %s8 = sld [smem:[#allocation0]]
  $region38: #{tpu_custom_call.1} parent=0
    _
  %s10 = ssub.s32 1, %s8
  %s11 = scalar_select 0, %s10, %s8
  %v12 = vstv %s6
  %13 = vst [vmem:[#allocation2] sm:$0x1] %v12
  $region1: #{tpu_custom_call.1} parent=0
    #allocation3 [shape = 'u8[1024]{0}', space=vmem, size = 0x400, scoped, tag = 'output window, operand 0, single buffered']
    #allocation4 [shape = 's32[1]{0}', space=sflag, size = 0x4, scoped, tag = 'scoped memory for tpu_custom_call.1']
    %14 = vsyncpa [#allocation4], 0
    // Predicated region
    $region2: #{tpu_custom_call.1} parent=1 // pred_check
      _
    $region3: #{tpu_custom_call.1} parent=1 // pred_check_branch
      %16 = sbr.rel (0) target = $region5
    $region4: #{tpu_custom_call.1} parent=1 // pred_region
      _
    $region5: #{tpu_custom_call.1} parent=1 // pred_fallthru
      _
    // Predicated region
    $region6: #{tpu_custom_call.1} parent=1 // pred_check
      _
    $region7: #{tpu_custom_call.1} parent=1 // pred_check_branch
      %18 = sbr.rel (0) target = $region9
    $region8: #{tpu_custom_call.1} parent=1 // pred_region
      _
    $region9: #{tpu_custom_call.1} parent=1 // pred_fallthru
      _
    // Predicated region
    $region10: #{tpu_custom_call.1} parent=1 // pred_check
      _
    $region11: #{tpu_custom_call.1} parent=1 // pred_check_branch
      %20 = sbr.rel (0) target = $region13
    $region12: #{tpu_custom_call.1} parent=1 // pred_region
      _
    $region13: #{tpu_custom_call.1} parent=1 // pred_fallthru
      _
    // Predicated region
    $region14: #{tpu_custom_call.1} parent=1 // pred_check
      _
    $region15: #{tpu_custom_call.1} parent=1 // pred_check_branch
      %22 = sbr.rel (0) target = $region17
    $region16: #{tpu_custom_call.1} parent=1 // pred_region
      _
    $region17: #{tpu_custom_call.1} parent=1 // pred_fallthru
      _
    // Predicated region
    $region18: #{tpu_custom_call.1} parent=1 // pred_check
      _
    $region19: #{tpu_custom_call.1} parent=1 // pred_check_branch
      %24 = sbr.rel (0) target = $region21
    $region20: #{tpu_custom_call.1} parent=1 // pred_region
      _
    $region21: #{tpu_custom_call.1} parent=1 // pred_fallthru
      _
    // Predicated region
    $region22: #{tpu_custom_call.1} parent=1 // pred_check
      _
    $region23: #{tpu_custom_call.1} parent=1 // pred_check_branch
      %26 = sbr.rel (0) target = $region25
    $region24: #{tpu_custom_call.1} parent=1 // pred_region
      _
    $region25: #{tpu_custom_call.1} parent=1 // pred_fallthru
      _
    // Predicated region
    $region26: #{tpu_custom_call.1} parent=1 // pred_check
      _
    $region27: #{tpu_custom_call.1} parent=1 // pred_check_branch
      %28 = sbr.rel (0) target = $region29
    $region28: #{tpu_custom_call.1} parent=1 // pred_region
      _
    $region29: #{tpu_custom_call.1} parent=1 // pred_fallthru
      _
    %v29 = vld [vmem:[%s0] sm:$0xf]
    %v30 = vld [vmem:[%s1] sm:$0xff]
    %v31 = vld [vmem:[%s1 + $0x8] sm:$0xff]
    %v32 = vld [vmem:[%s2] sm:$0xff]
    %v33 = vld [vmem:[%s2 + $0x8] sm:$0xff]
    %35 = vset.pattern.permute.xlu0 0
    %36 = vperm.xlu0 %35, %v32
    %v37 = vpop.permute.xlu0 %36
    %40 = vset.pattern.permute.xlu0 0
    %41 = vperm.xlu0 %40, %v33
    %v42 = vpop.permute.xlu0 %41
    %vm44 = vcmask 31744
    %v46 = vsel %vm44, %v30, 0
    %v49 = vsel %vm44, %v31, 0
    %vm51 = vcmask 1043456
    %v53 = vsel %vm51, %v29, 0
    %55 = vmatprep.subr.mxu0 0.0
    %56 = vmatpush1.msra.mxu0 %v53
    %57 = vmatprep.subr.mxu0 0.0
    %58 = vmatpush1.msra.mxu0 0.0
    %59 = vmatprep.subr.mxu0 0.0
    %60 = vmatpush1.msra.mxu0 0.0
    %61 = vmatprep.subr.mxu0 0.0
    %62 = vmatpush1.msra.mxu0 0.0
    %63 = vmatprep.subr.mxu0 0.0
    %64 = vmatpush1.msra.mxu0 0.0
    %65 = vmatprep.subr.mxu0 0.0
    %66 = vmatpush1.msra.mxu0 0.0
    %67 = vmatprep.subr.mxu0 0.0
    %68 = vmatpush1.msra.mxu0 0.0
    %69 = vmatprep.subr.mxu0 0.0
    %70 = vmatpush1.msra.mxu0 0.0
    %71 = vmatprep.subr.mxu0 0.0
    %72 = vmatpush1.msra.mxu0 0.0
    %73 = vmatprep.subr.mxu0 0.0
    %74 = vmatpush1.msra.mxu0 0.0
    %75 = vmatprep.subr.mxu0 0.0
    %76 = vmatpush1.msra.mxu0 0.0
    %77 = vmatprep.subr.mxu0 0.0
    %78 = vmatpush1.msra.mxu0 0.0
    %79 = vmatprep.subr.mxu0 0.0
    %80 = vmatpush1.msra.mxu0 0.0
    %81 = vmatprep.subr.mxu0 0.0
    %82 = vmatpush1.msra.mxu0 0.0
    %83 = vmatprep.subr.mxu0 0.0
    %84 = vmatpush1.msra.mxu0 0.0
    %85 = vmatprep.subr.mxu0 0.0
    %86 = vmatpush1.msra.mxu0 0.0
    %87 = vmatprep.subr.mxu0 0.0
    %88 = vmatpush1.msra.mxu0 0.0
    %89 = vmatprep.subr.mxu0 0.0
    %90 = vmatpush1.msra.mxu0 0.0
    %91 = vmatprep.subr.mxu0 0.0
    %92 = vmatpush1.msra.mxu0 0.0
    %93 = vmatprep.subr.mxu0 0.0
    %94 = vmatpush1.msra.mxu0 0.0
    %95 = vmatprep.subr.mxu0 0.0
    %96 = vmatpush1.msra.mxu0 0.0
    %97 = vmatprep.subr.mxu0 0.0
    %98 = vmatpush1.msra.mxu0 0.0
    %99 = vmatprep.subr.mxu0 0.0
    %100 = vmatpush1.msra.mxu0 0.0
    %101 = vmatprep.subr.mxu0 0.0
    %102 = vmatpush1.msra.mxu0 0.0
    %103 = vmatprep.subr.mxu0 0.0
    %104 = vmatpush1.msra.mxu0 0.0
    %105 = vmatprep.subr.mxu0 0.0
    %106 = vmatpush1.msra.mxu0 0.0
    %107 = vmatprep.subr.mxu0 0.0
    %108 = vmatpush1.msra.mxu0 0.0
    %109 = vmatprep.subr.mxu0 0.0
    %110 = vmatpush1.msra.mxu0 0.0
    %111 = vmatprep.subr.mxu0 0.0
    %112 = vmatpush1.msra.mxu0 0.0
    %113 = vmatprep.subr.mxu0 0.0
    %114 = vmatpush1.msra.mxu0 0.0
    %115 = vmatprep.subr.mxu0 0.0
    %116 = vmatpush1.msra.mxu0 0.0
    %117 = vmatprep.subr.mxu0 0.0
    %118 = vmatpush1.msra.mxu0 0.0
    %119 = vmatprep.mubr.f32.mxu0 0.0
    %120 = vmatmul.mubr.f32.gmra.mrb[0].mxu0 %v46
    %v121 = vpop.f32.mrb[0].mxu0
    %v122 = vadd.f32 %v37, %v121
    %v123 = vpop.f32.mrb[0].mxu0
    %124 = vmatprep.mubr.f32.mxu0 0.0
    %125 = vmatmul.mubr.f32.gmra.mrb[0].mxu0 %v49
    %v126 = vpop.f32.mrb[0].mxu0
    %v127 = vadd.f32 %v42, %v126
    %v128 = vpop.f32.mrb[0].mxu0
    %129 = vdwg.mxu0
    %v130 = vmax.f32 %v122, 0.0
    %v131 = vmax.f32 %v127, 0.0
    %v132 = vld [vmem:[%s3] sm:$0xff]
    %v133 = vld [vmem:[%s3 + $0x8] sm:$0xff]
    %v134 = vld [vmem:[%s3 + $0x10] sm:$0xff]
    %v135 = vld [vmem:[%s3 + $0x18] sm:$0xff]
    %v136 = vld [vmem:[%s4] sm:$0xff]
    %v137 = vld [vmem:[%s4 + $0x8] sm:$0xff]
    %v138 = vld [vmem:[%s4 + $0x10] sm:$0xff]
    %v139 = vld [vmem:[%s4 + $0x18] sm:$0xff]
    %141 = vset.pattern.permute.xlu0 0
    %142 = vperm.xlu0 %141, %v136
    %v143 = vpop.permute.xlu0 %142
    %146 = vset.pattern.permute.xlu0 0
    %147 = vperm.xlu0 %146, %v137
    %v148 = vpop.permute.xlu0 %147
    %151 = vset.pattern.permute.xlu0 0
    %152 = vperm.xlu0 %151, %v138
    %v153 = vpop.permute.xlu0 %152
    %156 = vset.pattern.permute.xlu0 0
    %157 = vperm.xlu0 %156, %v139
    %v158 = vpop.permute.xlu0 %157
    %vm160 = vcmask 130048
    %v162 = vsel %vm160, %v132, 0
    %v165 = vsel %vm160, %v133, 0
    %v168 = vsel %vm160, %v134, 0
    %v171 = vsel %vm160, %v135, 0
    %173 = vmatprep.subr.mxu0 0.0
    %174 = vmatpush1.msra.mxu0 %v130
    %175 = vmatprep.subr.mxu0 0.0
    %176 = vmatpush1.msra.mxu0 %v131
    %177 = vmatprep.subr.mxu0 0.0
    %178 = vmatpush1.msra.mxu0 0.0
    %179 = vmatprep.subr.mxu0 0.0
    %180 = vmatpush1.msra.mxu0 0.0
    %181 = vmatprep.subr.mxu0 0.0
    %182 = vmatpush1.msra.mxu0 0.0
    %183 = vmatprep.subr.mxu0 0.0
    %184 = vmatpush1.msra.mxu0 0.0
    %185 = vmatprep.subr.mxu0 0.0
    %186 = vmatpush1.msra.mxu0 0.0
    %187 = vmatprep.subr.mxu0 0.0
    %188 = vmatpush1.msra.mxu0 0.0
    %189 = vmatprep.subr.mxu0 0.0
    %190 = vmatpush1.msra.mxu0 0.0
    %191 = vmatprep.subr.mxu0 0.0
    %192 = vmatpush1.msra.mxu0 0.0
    %193 = vmatprep.subr.mxu0 0.0
    %194 = vmatpush1.msra.mxu0 0.0
    %195 = vmatprep.subr.mxu0 0.0
    %196 = vmatpush1.msra.mxu0 0.0
    %197 = vmatprep.subr.mxu0 0.0
    %198 = vmatpush1.msra.mxu0 0.0
    %199 = vmatprep.subr.mxu0 0.0
    %200 = vmatpush1.msra.mxu0 0.0
    %201 = vmatprep.subr.mxu0 0.0
    %202 = vmatpush1.msra.mxu0 0.0
    %203 = vmatprep.subr.mxu0 0.0
    %204 = vmatpush1.msra.mxu0 0.0
    %205 = vmatprep.subr.mxu0 0.0
    %206 = vmatpush1.msra.mxu0 0.0
    %207 = vmatprep.subr.mxu0 0.0
    %208 = vmatpush1.msra.mxu0 0.0
    %209 = vmatprep.subr.mxu0 0.0
    %210 = vmatpush1.msra.mxu0 0.0
    %211 = vmatprep.subr.mxu0 0.0
    %212 = vmatpush1.msra.mxu0 0.0
    %213 = vmatprep.subr.mxu0 0.0
    %214 = vmatpush1.msra.mxu0 0.0
    %215 = vmatprep.subr.mxu0 0.0
    %216 = vmatpush1.msra.mxu0 0.0
    %217 = vmatprep.subr.mxu0 0.0
    %218 = vmatpush1.msra.mxu0 0.0
    %219 = vmatprep.subr.mxu0 0.0
    %220 = vmatpush1.msra.mxu0 0.0
    %221 = vmatprep.subr.mxu0 0.0
    %222 = vmatpush1.msra.mxu0 0.0
    %223 = vmatprep.subr.mxu0 0.0
    %224 = vmatpush1.msra.mxu0 0.0
    %225 = vmatprep.subr.mxu0 0.0
    %226 = vmatpush1.msra.mxu0 0.0
    %227 = vmatprep.subr.mxu0 0.0
    %228 = vmatpush1.msra.mxu0 0.0
    %229 = vmatprep.subr.mxu0 0.0
    %230 = vmatpush1.msra.mxu0 0.0
    %231 = vmatprep.subr.mxu0 0.0
    %232 = vmatpush1.msra.mxu0 0.0
    %233 = vmatprep.subr.mxu0 0.0
    %234 = vmatpush1.msra.mxu0 0.0
    %235 = vmatprep.subr.mxu0 0.0
    %236 = vmatpush1.msra.mxu0 0.0
    %237 = vmatprep.mubr.f32.mxu0 0.0
    %238 = vmatmul.mubr.f32.gmra.mrb[0].mxu0 %v162
    %v239 = vpop.f32.mrb[0].mxu0
    %v240 = vadd.f32 %v143, %v239
    %v241 = vpop.f32.mrb[0].mxu0
    %242 = vmatprep.mubr.f32.mxu0 0.0
    %243 = vmatmul.mubr.f32.gmra.mrb[0].mxu0 %v165
    %v244 = vpop.f32.mrb[0].mxu0
    %v245 = vadd.f32 %v148, %v244
    %v246 = vpop.f32.mrb[0].mxu0
    %247 = vmatprep.mubr.f32.mxu0 0.0
    %248 = vmatmul.mubr.f32.gmra.mrb[0].mxu0 %v168
    %v249 = vpop.f32.mrb[0].mxu0
    %v250 = vadd.f32 %v153, %v249
    %v251 = vpop.f32.mrb[0].mxu0
    %252 = vmatprep.mubr.f32.mxu0 0.0
    %253 = vmatmul.mubr.f32.gmra.mrb[0].mxu0 %v171
    %v254 = vpop.f32.mrb[0].mxu0
    %v255 = vadd.f32 %v158, %v254
    %v256 = vpop.f32.mrb[0].mxu0
    %257 = vdwg.mxu0
    %v258 = vmax.f32 %v240, 0.0
    %v259 = vmax.f32 %v245, 0.0
    %v260 = vmax.f32 %v250, 0.0
    %v261 = vmax.f32 %v255, 0.0
    %v262 = vld [vmem:[%s5] sm:$0x1]
    %v263 = vld [vmem:[#allocation2] sm:$0x1]
    %265 = vset.pattern.permute.xlu0 0
    %266 = vperm.xlu0 %265, %v263
    %v267 = vpop.permute.xlu0 %266
    %v269 = vlaneseq
    %v270 = vshrl.u32 %v269, 7
    %v271 = vsub.s32 0, %v270
    %v272 = vrot.slane %v267, %v271
    %vm273 = vcmask 261120
    %v275 = vsel %vm273, %v262, 0
    %277 = vmatprep.subr.mxu0 0.0
    %278 = vmatpush1.msra.mxu0 %v258
    %279 = vmatprep.subr.mxu0 0.0
    %280 = vmatpush1.msra.mxu0 %v259
    %281 = vmatprep.subr.mxu0 0.0
    %282 = vmatpush1.msra.mxu0 %v260
    %283 = vmatprep.subr.mxu0 0.0
    %284 = vmatpush1.msra.mxu0 %v261
    %285 = vmatprep.subr.mxu0 0.0
    %286 = vmatpush1.msra.mxu0 0.0
    %287 = vmatprep.subr.mxu0 0.0
    %288 = vmatpush1.msra.mxu0 0.0
    %289 = vmatprep.subr.mxu0 0.0
    %290 = vmatpush1.msra.mxu0 0.0
    %291 = vmatprep.subr.mxu0 0.0
    %292 = vmatpush1.msra.mxu0 0.0
    %293 = vmatprep.subr.mxu0 0.0
    %294 = vmatpush1.msra.mxu0 0.0
    %295 = vmatprep.subr.mxu0 0.0
    %296 = vmatpush1.msra.mxu0 0.0
    %297 = vmatprep.subr.mxu0 0.0
    %298 = vmatpush1.msra.mxu0 0.0
    %299 = vmatprep.subr.mxu0 0.0
    %300 = vmatpush1.msra.mxu0 0.0
    %301 = vmatprep.subr.mxu0 0.0
    %302 = vmatpush1.msra.mxu0 0.0
    %303 = vmatprep.subr.mxu0 0.0
    %304 = vmatpush1.msra.mxu0 0.0
    %305 = vmatprep.subr.mxu0 0.0
    %306 = vmatpush1.msra.mxu0 0.0
    %307 = vmatprep.subr.mxu0 0.0
    %308 = vmatpush1.msra.mxu0 0.0
    %309 = vmatprep.subr.mxu0 0.0
    %310 = vmatpush1.msra.mxu0 0.0
    %311 = vmatprep.subr.mxu0 0.0
    %312 = vmatpush1.msra.mxu0 0.0
    %313 = vmatprep.subr.mxu0 0.0
    %314 = vmatpush1.msra.mxu0 0.0
    %315 = vmatprep.subr.mxu0 0.0
    %316 = vmatpush1.msra.mxu0 0.0
    %317 = vmatprep.subr.mxu0 0.0
    %318 = vmatpush1.msra.mxu0 0.0
    %319 = vmatprep.subr.mxu0 0.0
    %320 = vmatpush1.msra.mxu0 0.0
    %321 = vmatprep.subr.mxu0 0.0
    %322 = vmatpush1.msra.mxu0 0.0
    %323 = vmatprep.subr.mxu0 0.0
    %324 = vmatpush1.msra.mxu0 0.0
    %325 = vmatprep.subr.mxu0 0.0
    %326 = vmatpush1.msra.mxu0 0.0
    %327 = vmatprep.subr.mxu0 0.0
    %328 = vmatpush1.msra.mxu0 0.0
    %329 = vmatprep.subr.mxu0 0.0
    %330 = vmatpush1.msra.mxu0 0.0
    %331 = vmatprep.subr.mxu0 0.0
    %332 = vmatpush1.msra.mxu0 0.0
    %333 = vmatprep.subr.mxu0 0.0
    %334 = vmatpush1.msra.mxu0 0.0
    %335 = vmatprep.subr.mxu0 0.0
    %336 = vmatpush1.msra.mxu0 0.0
    %337 = vmatprep.subr.mxu0 0.0
    %338 = vmatpush1.msra.mxu0 0.0
    %339 = vmatprep.subr.mxu0 0.0
    %340 = vmatpush1.msra.mxu0 0.0
    %341 = vmatprep.mubr.f32.mxu0 0.0
    %342 = vmatmul.mubr.f32.gmra.mrb[0].mxu0 %v275
    %v343 = vpop.f32.mrb[0].mxu0
    %v344 = vadd.f32 %v272, %v343
    %v345 = vpop.f32.mrb[0].mxu0
    %346 = vdwg.mxu0
    %v347 = vmax.f32 %v344, -30.0
    %v348 = vmin.f32 %v347, 30.0
    %v349 = vmul.f32 %v348, 1.442695
    %v350 = vpow.pop %v349
    %v351 = vadd.f32 %v350, 1.0
    %v352 = vrcp.pop %v351
    %353 = vst [vmem:[#allocation3] sm:$0x1] %v352
    %v354 = vsub.f32 1.0, %v352
    %355 = vst [vmem:[#allocation3 + $0x1] sm:$0x1] %v354
    // Predicated region
    $region30: #{tpu_custom_call.1} parent=1 // pred_check
      _
    $region31: #{tpu_custom_call.1} parent=1 // pred_check_branch
      %357 = sbr.rel (0) target = $region33
    $region32: #{tpu_custom_call.1} parent=1 // pred_region
      %s359 = ssub.s32 32, 32
      %360 = vsyncadd [#allocation4], %s359
      %s362 = sshll.u32 [#allocation3], 4
      %s363 = int_to_ptr.vmem [resolvable:$true] %s362
      %365 = dma.vmem_to_hbm [thread:$0]  %s363, 32, %s7, [#allocation4]
    $region33: #{tpu_custom_call.1} parent=1 // pred_fallthru
      _
    // Predicated region
    $region34: #{tpu_custom_call.1} parent=1 // pred_check
      _
    $region35: #{tpu_custom_call.1} parent=1 // pred_check_branch
      %367 = sbr.rel (0) target = $region37
    $region36: #{tpu_custom_call.1} parent=1 // pred_region
      %368 = dma.done [#allocation4], 32
    $region37: #{tpu_custom_call.1} parent=1 // pred_fallthru
      _
    %369 = vsyncpa [#allocation4], 1

</llo_original>
